<compile_context>
chip_gen: v6e
topology: v6e:2x2x1
jax: 0.10.0
libtpu: 0.0.40
codegen_flags: <defaults>
</compile_context>

<pallas_src>
import functools
import math

import jax
import jax.numpy as jnp
from jax.experimental import pallas as pl
from jax.experimental.pallas import tpu as pltpu

WIN = 9
PAD = math.floor(WIN / 2)        # 4
WIN_SIZE = float(WIN * WIN)      # 81


def _band_matrix(n):
    """(n, n) 0/1 band matrix: band[i, j] = 1 iff |i - j| <= PAD (float32)."""
    idx = jnp.arange(n, dtype=jnp.int32)
    return (jnp.abs(idx[:, None] - idx[None, :]) <= PAD).astype(jnp.float32)


def _blockdiag_band_matrix(g, h):
    """(g*h, g*h) block-diagonal band: g copies of the (h, h) band along the
    diagonal.  Left-multiplying by it performs the 9-tall vertical box sum for
    all g row-stacked images at once without leaking across image borders."""
    idx = jnp.arange(g * h, dtype=jnp.int32)
    same_img = (idx[:, None] // h) == (idx[None, :] // h)
    in_band = jnp.abs(idx[:, None] - idx[None, :]) <= PAD
    return (same_img & in_band).astype(jnp.float32)


def _ncc_kernel(y_pred_ref, y_true_ref, b_w_ref, b_v_ref, out_ref, *, group_rows):
    """One grid step over `group_rows` = G*H row-stacked image rows.

    y_*_ref: (G*H, W) f32.  b_w_ref: (W, W) band.  b_v_ref: (G*H, G*H)
    block-diagonal band.  out_ref: (1, 8, 128) f32; the partial cc-sum of this
    block is broadcast into the whole (lane-dense) output tile.
    """
    GH = group_rows

    Ii = y_true_ref[...]     # (GH, W)
    Ji = y_pred_ref[...]

    # Five statistics for the whole group, stacked along sublanes: (5*GH, W).
    stats = jnp.concatenate([Ii, Ji, Ii * Ii, Ji * Ji, Ii * Ji], axis=0)

    # Horizontal 9-wide (zero-padded) box sum for everything at once: one MXU matmul.
    hsum = jnp.dot(stats, b_w_ref[...], preferred_element_type=jnp.float32)  # (5*GH, W)

    # Vertical 9-tall box sum: one matmul per statistic against the
    # block-diagonal band (covers every image in the group in one shot).
    # TODO(synk): if H % 8 != 0 these sublane slices are misaligned (correct,
    # but cost a relayout copy); the aligned main path has H % 8 == 0.
    b_v = b_v_ref[...]
    i_sum, j_sum, i2_sum, j2_sum, ij_sum = [
        jnp.dot(b_v, hsum[s * GH:(s + 1) * GH, :],
                preferred_element_type=jnp.float32)
        for s in range(5)
    ]

    # Simplified (mathematically identical) NCC algebra, vectorized over (GH, W).
    inv_win = 1.0 / WIN_SIZE
    cross = ij_sum - i_sum * j_sum * inv_win
    i_var = i2_sum - i_sum * i_sum * inv_win
    j_var = j2_sum - j_sum * j_sum * inv_win
    cc = (cross * cross) * pl.reciprocal(i_var * j_var + 1e-05, approx=True)

    out_ref[...] = jnp.full((1, 8, 128), jnp.sum(cc), dtype=jnp.float32)


def _pick_group(n, h, w, max_rows=256, max_group=8, budget_bytes=8 * 1024 * 1024):
    """Images per grid step: amortize the ~0.35us/step overhead on small images
    while (a) keeping the block-diagonal vertical matmul MXU-sized (<= 256 rows)
    and (b) keeping the working set well inside scoped VMEM on every TPU gen."""
    if h % 8 != 0:
        # Full-extent block keeps Mosaic's (8, 128) block rule trivially satisfied.
        # TODO(synk): if H % 8 != 0 and N*H*W is huge, this single block may not
        # fit VMEM; add halo'd row-strip tiling for that case.
        return n
    per_img = 24 * h * w * 4          # ~24 live f32 HxW slabs per image
    g = max(1, min(n, max_group,
                   max(1, max_rows // h),
                   budget_bytes // max(per_img, 1)))
    while g > 1 and n % g != 0:
        g -= 1
    return g


def ncc_loss(y_pred, y_true):
    """Pallas NCC loss. y_pred, y_true: (N, 1, H, W). Returns scalar -mean(cc)."""
    assert y_pred.shape == y_true.shape and y_pred.ndim == 4
    n, c, h, w = y_pred.shape
    assert c == 1, "sum filter is [1, 1, 9, 9] -> single-channel inputs"

    # Layout plumbing only: drop the channel dim and row-stack the batch.
    yp = y_pred.astype(jnp.float32).reshape(n * h, w)
    yt = y_true.astype(jnp.float32).reshape(n * h, w)

    g = _pick_group(n, h, w)
    nb = n // g
    gh = g * h

    # Constant band matrices, built once outside the kernel (index_map pins
    # them to block (0, 0) so they stay VMEM-resident across grid steps).
    b_w = _band_matrix(w)                    # (W, W)  horizontal window
    b_v = _blockdiag_band_matrix(g, h)       # (G*H, G*H) vertical window

    # TODO(synk): for very large images (>= ~768^2 on v7x's 64 MiB VMEM) add
    # halo'd row-strip tiling; this version keeps whole images VMEM-resident.
    out = pl.pallas_call(
        functools.partial(_ncc_kernel, group_rows=gh),
        out_shape=jax.ShapeDtypeStruct((nb, 8, 128), jnp.float32),
        grid=(nb,),
        in_specs=[
            pl.BlockSpec((gh, w), lambda i: (i, 0)),      # y_pred
            pl.BlockSpec((gh, w), lambda i: (i, 0)),      # y_true
            pl.BlockSpec((w, w), lambda i: (0, 0)),       # horizontal band
            pl.BlockSpec((gh, gh), lambda i: (0, 0)),     # vertical block-diag band
        ],
        out_specs=pl.BlockSpec((1, 8, 128), lambda i: (i, 0, 0)),
        compiler_params=pltpu.CompilerParams(
            dimension_semantics=("parallel",),
            vmem_limit_bytes=64 * 1024 * 1024,
        ),
    )(yp, yt, b_w, b_v)

    per_block = out[:, 0, 0]                      # one partial cc-sum per grid step
    return -(jnp.sum(per_block) / (n * c * h * w))


def _ncc_loss_ref(y_pred, y_true):
    """Pure-JAX reference (lax conv), mirrors the PyTorch module exactly."""
    ii, ji = y_true, y_pred
    filt = jnp.ones((1, 1, WIN, WIN), jnp.float32)
    conv = lambda x: jax.lax.conv_general_dilated(
        x, filt, window_strides=(1, 1), padding=[(PAD, PAD), (PAD, PAD)],
        dimension_numbers=("NCHW", "OIHW", "NCHW"))
    i_sum, j_sum = conv(ii), conv(ji)
    i2_sum, j2_sum, ij_sum = conv(ii * ii), conv(ji * ji), conv(ii * ji)
    u_i, u_j = i_sum / WIN_SIZE, j_sum / WIN_SIZE
    cross = ij_sum - u_j * i_sum - u_i * j_sum + u_i * u_j * WIN_SIZE
    i_var = i2_sum - 2 * u_i * i_sum + u_i * u_i * WIN_SIZE
    j_var = j2_sum - 2 * u_j * j_sum + u_j * u_j * WIN_SIZE
    cc = cross * cross / (i_var * j_var + 1e-05)
    return -jnp.mean(cc)


if __name__ == "__main__":
    key = jax.random.PRNGKey(0)
    k1, k2 = jax.random.split(key)
    N, C, H, W = 2, 1, 16, 16
    y_pred = jax.random.uniform(k1, (N, C, H, W), dtype=jnp.float32)
    y_true = jax.random.uniform(k2, (N, C, H, W), dtype=jnp.float32)

    loss = jax.jit(ncc_loss)(y_pred, y_true)
    jax.block_until_ready(loss)

    ref = _ncc_loss_ref(y_pred, y_true)
    # Tolerance slightly looser than 1e-4 because cc uses the EUP approximate
    # reciprocal (pl.reciprocal(..., approx=True)); the box sums themselves are exact.
    assert jnp.allclose(loss, ref, rtol=5e-3, atol=5e-3), (loss, ref)

    print("KERNEL_OK")
</pallas_src>

<mosaic_0001>
module attributes {stable_mosaic.version = 11 : i64} {
  func.func @_ncc_kernel(%arg0: i32, %arg1: memref<32x16xf32, #tpu.memory_space<vmem>>, %arg2: memref<32x16xf32, #tpu.memory_space<vmem>>, %arg3: memref<16x16xf32, #tpu.memory_space<vmem>>, %arg4: memref<32x32xf32, #tpu.memory_space<vmem>>, %arg5: memref<1x8x128xf32, #tpu.memory_space<vmem>>) attributes {dimension_semantics = [#tpu.dimension_semantics<parallel>], iteration_bounds = array<i64: 1>, scalar_prefetch = 0 : i64, scratch_operands = 0 : i64, tpu.core_type = #tpu.core_type<tc>, window_params = [{transform_indices = @transform_0, window_bounds = array<i64: 32, 16>}, {transform_indices = @transform_1, window_bounds = array<i64: 32, 16>}, {pipeline_mode = #tpu.pipeline_mode<synchronous>, transform_indices = @transform_2, window_bounds = array<i64: 16, 16>}, {pipeline_mode = #tpu.pipeline_mode<synchronous>, transform_indices = @transform_3, window_bounds = array<i64: 32, 32>}, {transform_indices = @transform_4, window_bounds = array<i64: 1, 8, 128>}]} {
    %c0 = arith.constant 0 : index
    %c0_0 = arith.constant 0 : index
    %0 = vector.load %arg2[%c0, %c0_0] : memref<32x16xf32, #tpu.memory_space<vmem>>, vector<32x16xf32>
    %c0_1 = arith.constant 0 : index
    %c0_2 = arith.constant 0 : index
    %1 = vector.load %arg1[%c0_1, %c0_2] : memref<32x16xf32, #tpu.memory_space<vmem>>, vector<32x16xf32>
    %2 = arith.mulf %0, %0 : vector<32x16xf32>
    %3 = arith.mulf %1, %1 : vector<32x16xf32>
    %4 = arith.mulf %0, %1 : vector<32x16xf32>
    %5 = tpu.concatenate %0, %1, %2, %3, %4 in 0 : vector<32x16xf32>, vector<32x16xf32>, vector<32x16xf32>, vector<32x16xf32>, vector<32x16xf32> -> vector<160x16xf32>
    %c0_3 = arith.constant 0 : index
    %c0_4 = arith.constant 0 : index
    %6 = vector.load %arg3[%c0_3, %c0_4] : memref<16x16xf32, #tpu.memory_space<vmem>>, vector<16x16xf32>
    %cst = arith.constant dense<0.000000e+00> : vector<160x16xf32>
    %7 = tpu.matmul %5, %6, %cst {dimension_numbers = #tpu.dot_dimension_numbers<[1], [0], [0], [1], [0, 0, 1, 1], [], []>} : vector<160x16xf32>, vector<16x16xf32>, vector<160x16xf32> -> vector<160x16xf32>
    %c0_5 = arith.constant 0 : index
    %c0_6 = arith.constant 0 : index
    %8 = vector.load %arg4[%c0_5, %c0_6] : memref<32x32xf32, #tpu.memory_space<vmem>>, vector<32x32xf32>
    %9 = vector.extract_strided_slice %7 {offsets = [0, 0], sizes = [32, 16], strides = [1, 1]} : vector<160x16xf32> to vector<32x16xf32>
    %cst_7 = arith.constant dense<0.000000e+00> : vector<32x16xf32>
    %10 = tpu.matmul %8, %9, %cst_7 {dimension_numbers = #tpu.dot_dimension_numbers<[1], [0], [0], [1], [0, 0, 1, 1], [], []>} : vector<32x32xf32>, vector<32x16xf32>, vector<32x16xf32> -> vector<32x16xf32>
    %11 = vector.extract_strided_slice %7 {offsets = [32, 0], sizes = [32, 16], strides = [1, 1]} : vector<160x16xf32> to vector<32x16xf32>
    %cst_8 = arith.constant dense<0.000000e+00> : vector<32x16xf32>
    %12 = tpu.matmul %8, %11, %cst_8 {dimension_numbers = #tpu.dot_dimension_numbers<[1], [0], [0], [1], [0, 0, 1, 1], [], []>} : vector<32x32xf32>, vector<32x16xf32>, vector<32x16xf32> -> vector<32x16xf32>
    %13 = vector.extract_strided_slice %7 {offsets = [64, 0], sizes = [32, 16], strides = [1, 1]} : vector<160x16xf32> to vector<32x16xf32>
    %cst_9 = arith.constant dense<0.000000e+00> : vector<32x16xf32>
    %14 = tpu.matmul %8, %13, %cst_9 {dimension_numbers = #tpu.dot_dimension_numbers<[1], [0], [0], [1], [0, 0, 1, 1], [], []>} : vector<32x32xf32>, vector<32x16xf32>, vector<32x16xf32> -> vector<32x16xf32>
    %15 = vector.extract_strided_slice %7 {offsets = [96, 0], sizes = [32, 16], strides = [1, 1]} : vector<160x16xf32> to vector<32x16xf32>
    %cst_10 = arith.constant dense<0.000000e+00> : vector<32x16xf32>
    %16 = tpu.matmul %8, %15, %cst_10 {dimension_numbers = #tpu.dot_dimension_numbers<[1], [0], [0], [1], [0, 0, 1, 1], [], []>} : vector<32x32xf32>, vector<32x16xf32>, vector<32x16xf32> -> vector<32x16xf32>
    %17 = vector.extract_strided_slice %7 {offsets = [128, 0], sizes = [32, 16], strides = [1, 1]} : vector<160x16xf32> to vector<32x16xf32>
    %cst_11 = arith.constant dense<0.000000e+00> : vector<32x16xf32>
    %18 = tpu.matmul %8, %17, %cst_11 {dimension_numbers = #tpu.dot_dimension_numbers<[1], [0], [0], [1], [0, 0, 1, 1], [], []>} : vector<32x32xf32>, vector<32x16xf32>, vector<32x16xf32> -> vector<32x16xf32>
    %19 = arith.mulf %10, %12 : vector<32x16xf32>
    %cst_12 = arith.constant 0.0123456791 : f32
    %20 = vector.broadcast %cst_12 : f32 to vector<32x16xf32>
    %21 = arith.mulf %19, %20 : vector<32x16xf32>
    %22 = arith.subf %18, %21 : vector<32x16xf32>
    %23 = arith.mulf %10, %10 : vector<32x16xf32>
    %cst_13 = arith.constant 0.0123456791 : f32
    %24 = vector.broadcast %cst_13 : f32 to vector<32x16xf32>
    %25 = arith.mulf %23, %24 : vector<32x16xf32>
    %26 = arith.subf %14, %25 : vector<32x16xf32>
    %27 = arith.mulf %12, %12 : vector<32x16xf32>
    %cst_14 = arith.constant 0.0123456791 : f32
    %28 = vector.broadcast %cst_14 : f32 to vector<32x16xf32>
    %29 = arith.mulf %27, %28 : vector<32x16xf32>
    %30 = arith.subf %16, %29 : vector<32x16xf32>
    %31 = arith.mulf %22, %22 : vector<32x16xf32>
    %32 = arith.mulf %26, %30 : vector<32x16xf32>
    %cst_15 = arith.constant 9.99999974E-6 : f32
    %33 = vector.broadcast %cst_15 : f32 to vector<32x16xf32>
    %34 = arith.addf %32, %33 : vector<32x16xf32>
    %35 = tpu.reciprocal %34 {approx = true} : vector<32x16xf32> -> vector<32x16xf32>
    %36 = arith.mulf %31, %35 : vector<32x16xf32>
    %37 = vector.shape_cast %36 : vector<32x16xf32> to vector<1x32x16xf32>
    %cst_16 = arith.constant dense<0.000000e+00> : vector<1xf32>
    %38 = vector.multi_reduction <add>, %37, %cst_16 [1, 2] : vector<1x32x16xf32> to vector<1xf32>
    %39 = vector.shape_cast %38 : vector<1xf32> to vector<1x1x1xf32>
    %40 = vector.extract %39[0, 0, 0] : f32 from vector<1x1x1xf32>
    %41 = vector.broadcast %40 : f32 to vector<1x8x128xf32>
    %c0_17 = arith.constant 0 : index
    %c0_18 = arith.constant 0 : index
    %c0_19 = arith.constant 0 : index
    %42 = vector.load %arg5[%c0_17, %c0_18, %c0_19] : memref<1x8x128xf32, #tpu.memory_space<vmem>>, vector<1x8x128xf32>
    tpu.vector_store %arg5[%c0_17, %c0_18, %c0_19], %41 {strides = array<i32>} : memref<1x8x128xf32, #tpu.memory_space<vmem>>, vector<1x8x128xf32>,
    return
  }
  func.func @transform_0(%arg0: i32) -> (i32, i32) {
    %c0_i32 = arith.constant 0 : i32
    %c0_i32_0 = arith.constant 0 : i32
    return %arg0, %c0_i32 : i32, i32
  }
  func.func @transform_1(%arg0: i32) -> (i32, i32) {
    %c0_i32 = arith.constant 0 : i32
    %c0_i32_0 = arith.constant 0 : i32
    return %arg0, %c0_i32 : i32, i32
  }
  func.func @transform_2(%arg0: i32) -> (i32, i32) {
    %c0_i32 = arith.constant 0 : i32
    %c0_i32_0 = arith.constant 0 : i32
    %c0_i32_1 = arith.constant 0 : i32
    return %c0_i32, %c0_i32_0 : i32, i32
  }
  func.func @transform_3(%arg0: i32) -> (i32, i32) {
    %c0_i32 = arith.constant 0 : i32
    %c0_i32_0 = arith.constant 0 : i32
    %c0_i32_1 = arith.constant 0 : i32
    return %c0_i32, %c0_i32_0 : i32, i32
  }
  func.func @transform_4(%arg0: i32) -> (i32, i32, i32) {
    %c0_i32 = arith.constant 0 : i32
    %c0_i32_0 = arith.constant 0 : i32
    %c0_i32_1 = arith.constant 0 : i32
    return %arg0, %c0_i32, %c0_i32_0 : i32, i32, i32
  }
}

</mosaic_0001>

<llo_original>
// kernel: ncc_loss.1
$region0: #{ncc_loss.1}
  #allocation0 [shape = 'u32[]', space=smem, size = 0x4, offset = 0x4, fixed_abs, tag = 'smem constant byte address 0x4 - core index']
  #allocation1 [shape = 'u32[144,128]{1,0:T(1,128)}', space=vmem, size = 0x12000, scoped, tag = 'internal scratch']
  %s0 = inlined_call_operand.vmem [shape: f32[32,16], index: 0, kind: input, shape index: {}]
  %s1 = inlined_call_operand.hbm [shape: f32[32,16], index: 1, kind: input, shape index: {}]
  %s2 = inlined_call_operand.vmem [shape: f32[16,16], index: 2, kind: input, shape index: {}]
  %s3 = inlined_call_operand.vmem [shape: f32[32,32], index: 3, kind: input, shape index: {}]
  %s4 = inlined_call_operand.vmem [shape: f32[1,8,128], index: 4, kind: output, shape index: {}]
  %s5 = sld [smem:[#allocation0]]
  $region30: #{ncc_loss.1} parent=0
    _
  %s7 = ssub.s32 1, %s5
  %s8 = scalar_select 0, %s7, %s5
  $region1: #{ncc_loss.1} parent=0
    #allocation2 [shape = 'u8[16384]{0}', space=vmem, size = 0x4000, scoped, tag = 'input window, operand 1, single buffered']
    #allocation3 [shape = 's32[1]{0}', space=sflag, size = 0x4, scoped, tag = 'scoped memory for ncc_loss.1']
    %9 = vsyncpa [#allocation3], 0
    // Predicated region
    $region2: #{ncc_loss.1} parent=1 // pred_check
      _
    $region3: #{ncc_loss.1} parent=1 // pred_check_branch
      %11 = sbr.rel (0) target = $region5
    $region4: #{ncc_loss.1} parent=1 // pred_region
      _
    $region5: #{ncc_loss.1} parent=1 // pred_fallthru
      _
    // Predicated region
    $region6: #{ncc_loss.1} parent=1 // pred_check
      _
    $region7: #{ncc_loss.1} parent=1 // pred_check_branch
      %13 = sbr.rel (0) target = $region9
    $region8: #{ncc_loss.1} parent=1 // pred_region
      %s15 = ssub.s32 512, 512
      %16 = vsyncadd [#allocation3], %s15
      %s17 = sshll.u32 [#allocation2], 4
      %s18 = int_to_ptr.vmem [resolvable:$true] %s17
      %23 = dma.hbm_to_vmem [thread:$0]  %s1, 512, %s18, [#allocation3], 128, 128, 8
    $region9: #{ncc_loss.1} parent=1 // pred_fallthru
      _
    // Predicated region
    $region10: #{ncc_loss.1} parent=1 // pred_check
      _
    $region11: #{ncc_loss.1} parent=1 // pred_check_branch
      %25 = sbr.rel (0) target = $region13
    $region12: #{ncc_loss.1} parent=1 // pred_region
      _
    $region13: #{ncc_loss.1} parent=1 // pred_fallthru
      _
    // Predicated region
    $region14: #{ncc_loss.1} parent=1 // pred_check
      _
    $region15: #{ncc_loss.1} parent=1 // pred_check_branch
      %27 = sbr.rel (0) target = $region17
    $region16: #{ncc_loss.1} parent=1 // pred_region
      _
    $region17: #{ncc_loss.1} parent=1 // pred_fallthru
      _
    // Predicated region
    $region18: #{ncc_loss.1} parent=1 // pred_check
      _
    $region19: #{ncc_loss.1} parent=1 // pred_check_branch
      %29 = sbr.rel (0) target = $region21
    $region20: #{ncc_loss.1} parent=1 // pred_region
      %30 = dma.done [#allocation3], 512
    $region21: #{ncc_loss.1} parent=1 // pred_fallthru
      _
    %v31 = vld [vmem:[#allocation2] sm:$0xff]
    %v32 = vld [vmem:[#allocation2 + $0x8] sm:$0xff]
    %v33 = vld [vmem:[#allocation2 + $0x10] sm:$0xff]
    %v34 = vld [vmem:[#allocation2 + $0x18] sm:$0xff]
    %v35 = vld [vmem:[%s0] sm:$0xff]
    %v36 = vld [vmem:[%s0 + $0x8] sm:$0xff]
    %v37 = vld [vmem:[%s0 + $0x10] sm:$0xff]
    %v38 = vld [vmem:[%s0 + $0x18] sm:$0xff]
    %v39 = vmul.f32 %v31, %v31
    %v40 = vmul.f32 %v32, %v32
    %v41 = vmul.f32 %v33, %v33
    %v42 = vmul.f32 %v34, %v34
    %v43 = vmul.f32 %v35, %v35
    %v44 = vmul.f32 %v36, %v36
    %v45 = vmul.f32 %v37, %v37
    %v46 = vmul.f32 %v38, %v38
    %v47 = vmul.f32 %v31, %v35
    %v48 = vmul.f32 %v32, %v36
    %v49 = vmul.f32 %v33, %v37
    %v50 = vmul.f32 %v34, %v38
    %v51 = vld [vmem:[%s2] sm:$0xff]
    %v52 = vld [vmem:[%s2 + $0x8] sm:$0xff]
    %vm53 = vcmask 130048
    %v55 = vsel %vm53, %v31, 0
    %v58 = vsel %vm53, %v32, 0
    %v61 = vsel %vm53, %v33, 0
    %v64 = vsel %vm53, %v34, 0
    %v67 = vsel %vm53, %v35, 0
    %v70 = vsel %vm53, %v36, 0
    %v73 = vsel %vm53, %v37, 0
    %v76 = vsel %vm53, %v38, 0
    %v79 = vsel %vm53, %v39, 0
    %v82 = vsel %vm53, %v40, 0
    %v85 = vsel %vm53, %v41, 0
    %v88 = vsel %vm53, %v42, 0
    %v91 = vsel %vm53, %v43, 0
    %v94 = vsel %vm53, %v44, 0
    %v97 = vsel %vm53, %v45, 0
    %v100 = vsel %vm53, %v46, 0
    %v103 = vsel %vm53, %v47, 0
    %v106 = vsel %vm53, %v48, 0
    %v109 = vsel %vm53, %v49, 0
    %v112 = vsel %vm53, %v50, 0
    %114 = vmatprep.subr.mxu0 0.0
    %115 = vmatpush1.msra.mxu0 0.0
    %116 = vmatprep.subr.mxu0 0.0
    %117 = vmatpush1.msra.mxu0 0.0
    %118 = vmatprep.subr.mxu0 0.0
    %119 = vmatpush1.msra.mxu0 0.0
    %120 = vmatprep.subr.mxu0 0.0
    %121 = vmatpush1.msra.mxu0 0.0
    %122 = vmatprep.subr.mxu0 0.0
    %123 = vmatpush1.msra.mxu0 0.0
    %124 = vmatprep.subr.mxu0 0.0
    %125 = vmatpush1.msra.mxu0 0.0
    %126 = vmatprep.subr.mxu0 0.0
    %127 = vmatpush1.msra.mxu0 0.0
    %128 = vmatprep.subr.mxu0 0.0
    %129 = vmatpush1.msra.mxu0 0.0
    %130 = vmatprep.subr.mxu0 0.0
    %131 = vmatpush1.msra.mxu0 0.0
    %132 = vmatprep.subr.mxu0 0.0
    %133 = vmatpush1.msra.mxu0 0.0
    %134 = vmatprep.subr.mxu0 0.0
    %135 = vmatpush1.msra.mxu0 0.0
    %136 = vmatprep.subr.mxu0 0.0
    %137 = vmatpush1.msra.mxu0 0.0
    %138 = vmatprep.subr.mxu0 0.0
    %139 = vmatpush1.msra.mxu0 0.0
    %140 = vmatprep.subr.mxu0 0.0
    %141 = vmatpush1.msra.mxu0 0.0
    %142 = vmatprep.subr.mxu0 0.0
    %143 = vmatpush1.msra.mxu0 %v52
    %144 = vmatprep.subr.mxu0 0.0
    %145 = vmatpush1.msra.mxu0 %v51
    %146 = vmatprep.subr.mxu0 0.0
    %147 = vmatpush2.msra.mxu0 0.0
    %148 = vmatprep.subr.mxu0 0.0
    %149 = vmatpush2.msra.mxu0 0.0
    %150 = vmatprep.subr.mxu0 0.0
    %151 = vmatpush2.msra.mxu0 0.0
    %152 = vmatprep.subr.mxu0 0.0
    %153 = vmatpush2.msra.mxu0 0.0
    %154 = vmatprep.subr.mxu0 0.0
    %155 = vmatpush2.msra.mxu0 0.0
    %156 = vmatprep.subr.mxu0 0.0
    %157 = vmatpush2.msra.mxu0 0.0
    %158 = vmatprep.subr.mxu0 0.0
    %159 = vmatpush2.msra.mxu0 0.0
    %160 = vmatprep.subr.mxu0 0.0
    %161 = vmatpush2.msra.mxu0 0.0
    %162 = vmatprep.subr.mxu0 0.0
    %163 = vmatpush2.msra.mxu0 0.0
    %164 = vmatprep.subr.mxu0 0.0
    %165 = vmatpush2.msra.mxu0 0.0
    %166 = vmatprep.subr.mxu0 0.0
    %167 = vmatpush2.msra.mxu0 0.0
    %168 = vmatprep.subr.mxu0 0.0
    %169 = vmatpush2.msra.mxu0 0.0
    %170 = vmatprep.subr.mxu0 0.0
    %171 = vmatpush2.msra.mxu0 0.0
    %172 = vmatprep.subr.mxu0 0.0
    %173 = vmatpush2.msra.mxu0 0.0
    %174 = vmatprep.subr.mxu0 0.0
    %175 = vmatpush2.msra.mxu0 0.0
    %176 = vmatprep.subr.mxu0 0.0
    %177 = vmatpush2.msra.mxu0 0.0
    %178 = vmatprep.mubr.f32.mxu0 0.0
    %179 = vmatmul.mubr.f32.gmra.mxu0 %v55
    %v180 = vpop.f32.mrf.mxu0
    %v181 = vadd.f32 0.0, %v180
    %v182 = vpop.f32.mrf.mxu0
    %183 = vmatprep.mubr.f32.mxu0 0.0
    %184 = vmatmul.mubr.f32.gmra.mxu0 %v58
    %v185 = vpop.f32.mrf.mxu0
    %v186 = vadd.f32 0.0, %v185
    %v187 = vpop.f32.mrf.mxu0
    %188 = vmatprep.mubr.f32.mxu0 0.0
    %189 = vmatmul.mubr.f32.gmra.mxu0 %v61
    %v190 = vpop.f32.mrf.mxu0
    %v191 = vadd.f32 0.0, %v190
    %v192 = vpop.f32.mrf.mxu0
    %193 = vmatprep.mubr.f32.mxu0 0.0
    %194 = vmatmul.mubr.f32.gmra.mxu0 %v64
    %v195 = vpop.f32.mrf.mxu0
    %v196 = vadd.f32 0.0, %v195
    %v197 = vpop.f32.mrf.mxu0
    %198 = vmatprep.mubr.f32.mxu0 0.0
    %199 = vmatmul.mubr.f32.gmra.mxu0 %v67
    %v200 = vpop.f32.mrf.mxu0
    %v201 = vadd.f32 0.0, %v200
    %v202 = vpop.f32.mrf.mxu0
    %203 = vmatprep.mubr.f32.mxu0 0.0
    %204 = vmatmul.mubr.f32.gmra.mxu0 %v70
    %v205 = vpop.f32.mrf.mxu0
    %v206 = vadd.f32 0.0, %v205
    %v207 = vpop.f32.mrf.mxu0
    %208 = vmatprep.mubr.f32.mxu0 0.0
    %209 = vmatmul.mubr.f32.gmra.mxu0 %v73
    %v210 = vpop.f32.mrf.mxu0
    %v211 = vadd.f32 0.0, %v210
    %v212 = vpop.f32.mrf.mxu0
    %213 = vmatprep.mubr.f32.mxu0 0.0
    %214 = vmatmul.mubr.f32.gmra.mxu0 %v76
    %v215 = vpop.f32.mrf.mxu0
    %v216 = vadd.f32 0.0, %v215
    %v217 = vpop.f32.mrf.mxu0
    %218 = vmatprep.mubr.f32.mxu0 0.0
    %219 = vmatmul.mubr.f32.gmra.mxu0 %v79
    %v220 = vpop.f32.mrf.mxu0
    %v221 = vadd.f32 0.0, %v220
    %v222 = vpop.f32.mrf.mxu0
    %223 = vmatprep.mubr.f32.mxu0 0.0
    %224 = vmatmul.mubr.f32.gmra.mxu0 %v82
    %v225 = vpop.f32.mrf.mxu0
    %v226 = vadd.f32 0.0, %v225
    %v227 = vpop.f32.mrf.mxu0
    %228 = vmatprep.mubr.f32.mxu0 0.0
    %229 = vmatmul.mubr.f32.gmra.mxu0 %v85
    %v230 = vpop.f32.mrf.mxu0
    %v231 = vadd.f32 0.0, %v230
    %v232 = vpop.f32.mrf.mxu0
    %233 = vmatprep.mubr.f32.mxu0 0.0
    %234 = vmatmul.mubr.f32.gmra.mxu0 %v88
    %v235 = vpop.f32.mrf.mxu0
    %v236 = vadd.f32 0.0, %v235
    %v237 = vpop.f32.mrf.mxu0
    %238 = vmatprep.mubr.f32.mxu0 0.0
    %239 = vmatmul.mubr.f32.gmra.mxu0 %v91
    %v240 = vpop.f32.mrf.mxu0
    %v241 = vadd.f32 0.0, %v240
    %v242 = vpop.f32.mrf.mxu0
    %243 = vmatprep.mubr.f32.mxu0 0.0
    %244 = vmatmul.mubr.f32.gmra.mxu0 %v94
    %v245 = vpop.f32.mrf.mxu0
    %v246 = vadd.f32 0.0, %v245
    %v247 = vpop.f32.mrf.mxu0
    %248 = vmatprep.mubr.f32.mxu0 0.0
    %249 = vmatmul.mubr.f32.gmra.mxu0 %v97
    %v250 = vpop.f32.mrf.mxu0
    %v251 = vadd.f32 0.0, %v250
    %v252 = vpop.f32.mrf.mxu0
    %253 = vmatprep.mubr.f32.mxu0 0.0
    %254 = vmatmul.mubr.f32.gmra.mxu0 %v100
    %v255 = vpop.f32.mrf.mxu0
    %v256 = vadd.f32 0.0, %v255
    %v257 = vpop.f32.mrf.mxu0
    %258 = vmatprep.mubr.f32.mxu0 0.0
    %259 = vmatmul.mubr.f32.gmra.mxu0 %v103
    %v260 = vpop.f32.mrf.mxu0
    %v261 = vadd.f32 0.0, %v260
    %v262 = vpop.f32.mrf.mxu0
    %263 = vmatprep.mubr.f32.mxu0 0.0
    %264 = vmatmul.mubr.f32.gmra.mxu0 %v106
    %v265 = vpop.f32.mrf.mxu0
    %v266 = vadd.f32 0.0, %v265
    %v267 = vpop.f32.mrf.mxu0
    %268 = vmatprep.mubr.f32.mxu0 0.0
    %269 = vmatmul.mubr.f32.gmra.mxu0 %v109
    %v270 = vpop.f32.mrf.mxu0
    %v271 = vadd.f32 0.0, %v270
    %v272 = vpop.f32.mrf.mxu0
    %273 = vmatprep.mubr.f32.mxu0 0.0
    %274 = vmatmul.mubr.f32.gmra.mxu0 %v112
    %v275 = vpop.f32.mrf.mxu0
    %v276 = vadd.f32 0.0, %v275
    %v277 = vpop.f32.mrf.mxu0
    %278 = vdwg.mxu0
    %v279 = vld [vmem:[%s3] sm:$0xff]
    %v280 = vld [vmem:[%s3 + $0x8] sm:$0xff]
    %v281 = vld [vmem:[%s3 + $0x10] sm:$0xff]
    %v282 = vld [vmem:[%s3 + $0x18] sm:$0xff]
    %vm283 = vcmask 261120
    %v285 = vsel %vm283, %v279, 0
    %v288 = vsel %vm283, %v280, 0
    %v291 = vsel %vm283, %v281, 0
    %v294 = vsel %vm283, %v282, 0
    %296 = vmatprep.subr.mxu0 0.0
    %297 = vmatpush1.msra.mxu0 0.0
    %298 = vmatprep.subr.mxu0 0.0
    %299 = vmatpush1.msra.mxu0 0.0
    %300 = vmatprep.subr.mxu0 0.0
    %301 = vmatpush1.msra.mxu0 0.0
    %302 = vmatprep.subr.mxu0 0.0
    %303 = vmatpush1.msra.mxu0 0.0
    %304 = vmatprep.subr.mxu0 0.0
    %305 = vmatpush1.msra.mxu0 0.0
    %306 = vmatprep.subr.mxu0 0.0
    %307 = vmatpush1.msra.mxu0 0.0
    %308 = vmatprep.subr.mxu0 0.0
    %309 = vmatpush1.msra.mxu0 0.0
    %310 = vmatprep.subr.mxu0 0.0
    %311 = vmatpush1.msra.mxu0 0.0
    %312 = vmatprep.subr.mxu0 0.0
    %313 = vmatpush1.msra.mxu0 0.0
    %314 = vmatprep.subr.mxu0 0.0
    %315 = vmatpush1.msra.mxu0 0.0
    %316 = vmatprep.subr.mxu0 0.0
    %317 = vmatpush1.msra.mxu0 0.0
    %318 = vmatprep.subr.mxu0 0.0
    %319 = vmatpush1.msra.mxu0 0.0
    %320 = vmatprep.subr.mxu0 0.0
    %321 = vmatpush1.msra.mxu0 %v196
    %322 = vmatprep.subr.mxu0 0.0
    %323 = vmatpush1.msra.mxu0 %v191
    %324 = vmatprep.subr.mxu0 0.0
    %325 = vmatpush1.msra.mxu0 %v186
    %326 = vmatprep.subr.mxu0 0.0
    %327 = vmatpush1.msra.mxu0 %v181
    %328 = vmatprep.subr.mxu0 0.0
    %329 = vmatpush2.msra.mxu0 0.0
    %330 = vmatprep.subr.mxu0 0.0
    %331 = vmatpush2.msra.mxu0 0.0
    %332 = vmatprep.subr.mxu0 0.0
    %333 = vmatpush2.msra.mxu0 0.0
    %334 = vmatprep.subr.mxu0 0.0
    %335 = vmatpush2.msra.mxu0 0.0
    %336 = vmatprep.subr.mxu0 0.0
    %337 = vmatpush2.msra.mxu0 0.0
    %338 = vmatprep.subr.mxu0 0.0
    %339 = vmatpush2.msra.mxu0 0.0
    %340 = vmatprep.subr.mxu0 0.0
    %341 = vmatpush2.msra.mxu0 0.0
    %342 = vmatprep.subr.mxu0 0.0
    %343 = vmatpush2.msra.mxu0 0.0
    %344 = vmatprep.subr.mxu0 0.0
    %345 = vmatpush2.msra.mxu0 0.0
    %346 = vmatprep.subr.mxu0 0.0
    %347 = vmatpush2.msra.mxu0 0.0
    %348 = vmatprep.subr.mxu0 0.0
    %349 = vmatpush2.msra.mxu0 0.0
    %350 = vmatprep.subr.mxu0 0.0
    %351 = vmatpush2.msra.mxu0 0.0
    %352 = vmatprep.subr.mxu0 0.0
    %353 = vmatpush2.msra.mxu0 0.0
    %354 = vmatprep.subr.mxu0 0.0
    %355 = vmatpush2.msra.mxu0 0.0
    %356 = vmatprep.subr.mxu0 0.0
    %357 = vmatpush2.msra.mxu0 0.0
    %358 = vmatprep.subr.mxu0 0.0
    %359 = vmatpush2.msra.mxu0 0.0
    %360 = vmatprep.mubr.f32.mxu0 0.0
    %361 = vmatmul.mubr.f32.gmra.mxu0 %v285
    %v362 = vpop.f32.mrf.mxu0
    %v363 = vadd.f32 0.0, %v362
    %v364 = vpop.f32.mrf.mxu0
    %365 = vmatprep.mubr.f32.mxu0 0.0
    %366 = vmatmul.mubr.f32.gmra.mxu0 %v288
    %v367 = vpop.f32.mrf.mxu0
    %v368 = vadd.f32 0.0, %v367
    %v369 = vpop.f32.mrf.mxu0
    %370 = vmatprep.mubr.f32.mxu0 0.0
    %371 = vmatmul.mubr.f32.gmra.mxu0 %v291
    %v372 = vpop.f32.mrf.mxu0
    %v373 = vadd.f32 0.0, %v372
    %v374 = vpop.f32.mrf.mxu0
    %375 = vmatprep.mubr.f32.mxu0 0.0
    %376 = vmatmul.mubr.f32.gmra.mxu0 %v294
    %v377 = vpop.f32.mrf.mxu0
    %v378 = vadd.f32 0.0, %v377
    %v379 = vpop.f32.mrf.mxu0
    %380 = vdwg.mxu0
    %381 = vmatprep.subr.mxu0 0.0
    %382 = vmatpush1.msra.mxu0 0.0
    %383 = vmatprep.subr.mxu0 0.0
    %384 = vmatpush1.msra.mxu0 0.0
    %385 = vmatprep.subr.mxu0 0.0
    %386 = vmatpush1.msra.mxu0 0.0
    %387 = vmatprep.subr.mxu0 0.0
    %388 = vmatpush1.msra.mxu0 0.0
    %389 = vmatprep.subr.mxu0 0.0
    %390 = vmatpush1.msra.mxu0 0.0
    %391 = vmatprep.subr.mxu0 0.0
    %392 = vmatpush1.msra.mxu0 0.0
    %393 = vmatprep.subr.mxu0 0.0
    %394 = vmatpush1.msra.mxu0 0.0
    %395 = vmatprep.subr.mxu0 0.0
    %396 = vmatpush1.msra.mxu0 0.0
    %397 = vmatprep.subr.mxu0 0.0
    %398 = vmatpush1.msra.mxu0 0.0
    %399 = vmatprep.subr.mxu0 0.0
    %400 = vmatpush1.msra.mxu0 0.0
    %401 = vmatprep.subr.mxu0 0.0
    %402 = vmatpush1.msra.mxu0 0.0
    %403 = vmatprep.subr.mxu0 0.0
    %404 = vmatpush1.msra.mxu0 0.0
    %405 = vmatprep.subr.mxu0 0.0
    %406 = vmatpush1.msra.mxu0 %v216
    %407 = vmatprep.subr.mxu0 0.0
    %408 = vmatpush1.msra.mxu0 %v211
    %409 = vmatprep.subr.mxu0 0.0
    %410 = vmatpush1.msra.mxu0 %v206
    %411 = vmatprep.subr.mxu0 0.0
    %412 = vmatpush1.msra.mxu0 %v201
    %413 = vmatprep.subr.mxu0 0.0
    %414 = vmatpush2.msra.mxu0 0.0
    %415 = vmatprep.subr.mxu0 0.0
    %416 = vmatpush2.msra.mxu0 0.0
    %417 = vmatprep.subr.mxu0 0.0
    %418 = vmatpush2.msra.mxu0 0.0
    %419 = vmatprep.subr.mxu0 0.0
    %420 = vmatpush2.msra.mxu0 0.0
    %421 = vmatprep.subr.mxu0 0.0
    %422 = vmatpush2.msra.mxu0 0.0
    %423 = vmatprep.subr.mxu0 0.0
    %424 = vmatpush2.msra.mxu0 0.0
    %425 = vmatprep.subr.mxu0 0.0
    %426 = vmatpush2.msra.mxu0 0.0
    %427 = vmatprep.subr.mxu0 0.0
    %428 = vmatpush2.msra.mxu0 0.0
    %429 = vmatprep.subr.mxu0 0.0
    %430 = vmatpush2.msra.mxu0 0.0
    %431 = vmatprep.subr.mxu0 0.0
    %432 = vmatpush2.msra.mxu0 0.0
    %433 = vmatprep.subr.mxu0 0.0
    %434 = vmatpush2.msra.mxu0 0.0
    %435 = vmatprep.subr.mxu0 0.0
    %436 = vmatpush2.msra.mxu0 0.0
    %437 = vmatprep.subr.mxu0 0.0
    %438 = vmatpush2.msra.mxu0 0.0
    %439 = vmatprep.subr.mxu0 0.0
    %440 = vmatpush2.msra.mxu0 0.0
    %441 = vmatprep.subr.mxu0 0.0
    %442 = vmatpush2.msra.mxu0 0.0
    %443 = vmatprep.subr.mxu0 0.0
    %444 = vmatpush2.msra.mxu0 0.0
    %445 = vmatprep.mubr.f32.mxu0 0.0
    %446 = vmatmul.mubr.f32.gmra.mxu0 %v285
    %v447 = vpop.f32.mrf.mxu0
    %v448 = vadd.f32 0.0, %v447
    %v449 = vpop.f32.mrf.mxu0
    %450 = vmatprep.mubr.f32.mxu0 0.0
    %451 = vmatmul.mubr.f32.gmra.mxu0 %v288
    %v452 = vpop.f32.mrf.mxu0
    %v453 = vadd.f32 0.0, %v452
    %v454 = vpop.f32.mrf.mxu0
    %455 = vmatprep.mubr.f32.mxu0 0.0
    %456 = vmatmul.mubr.f32.gmra.mxu0 %v291
    %v457 = vpop.f32.mrf.mxu0
    %v458 = vadd.f32 0.0, %v457
    %v459 = vpop.f32.mrf.mxu0
    %460 = vmatprep.mubr.f32.mxu0 0.0
    %461 = vmatmul.mubr.f32.gmra.mxu0 %v294
    %v462 = vpop.f32.mrf.mxu0
    %v463 = vadd.f32 0.0, %v462
    %v464 = vpop.f32.mrf.mxu0
    %465 = vdwg.mxu0
    %466 = vmatprep.subr.mxu0 0.0
    %467 = vmatpush1.msra.mxu0 0.0
    %468 = vmatprep.subr.mxu0 0.0
    %469 = vmatpush1.msra.mxu0 0.0
    %470 = vmatprep.subr.mxu0 0.0
    %471 = vmatpush1.msra.mxu0 0.0
    %472 = vmatprep.subr.mxu0 0.0
    %473 = vmatpush1.msra.mxu0 0.0
    %474 = vmatprep.subr.mxu0 0.0
    %475 = vmatpush1.msra.mxu0 0.0
    %476 = vmatprep.subr.mxu0 0.0
    %477 = vmatpush1.msra.mxu0 0.0
    %478 = vmatprep.subr.mxu0 0.0
    %479 = vmatpush1.msra.mxu0 0.0
    %480 = vmatprep.subr.mxu0 0.0
    %481 = vmatpush1.msra.mxu0 0.0
    %482 = vmatprep.subr.mxu0 0.0
    %483 = vmatpush1.msra.mxu0 0.0
    %484 = vmatprep.subr.mxu0 0.0
    %485 = vmatpush1.msra.mxu0 0.0
    %486 = vmatprep.subr.mxu0 0.0
    %487 = vmatpush1.msra.mxu0 0.0
    %488 = vmatprep.subr.mxu0 0.0
    %489 = vmatpush1.msra.mxu0 0.0
    %490 = vmatprep.subr.mxu0 0.0
    %491 = vmatpush1.msra.mxu0 %v236
    %492 = vmatprep.subr.mxu0 0.0
    %493 = vmatpush1.msra.mxu0 %v231
    %494 = vmatprep.subr.mxu0 0.0
    %495 = vmatpush1.msra.mxu0 %v226
    %496 = vmatprep.subr.mxu0 0.0
    %497 = vmatpush1.msra.mxu0 %v221
    %498 = vmatprep.subr.mxu0 0.0
    %499 = vmatpush2.msra.mxu0 0.0
    %500 = vmatprep.subr.mxu0 0.0
    %501 = vmatpush2.msra.mxu0 0.0
    %502 = vmatprep.subr.mxu0 0.0
    %503 = vmatpush2.msra.mxu0 0.0
    %504 = vmatprep.subr.mxu0 0.0
    %505 = vmatpush2.msra.mxu0 0.0
    %506 = vmatprep.subr.mxu0 0.0
    %507 = vmatpush2.msra.mxu0 0.0
    %508 = vmatprep.subr.mxu0 0.0
    %509 = vmatpush2.msra.mxu0 0.0
    %510 = vmatprep.subr.mxu0 0.0
    %511 = vmatpush2.msra.mxu0 0.0
    %512 = vmatprep.subr.mxu0 0.0
    %513 = vmatpush2.msra.mxu0 0.0
    %514 = vmatprep.subr.mxu0 0.0
    %515 = vmatpush2.msra.mxu0 0.0
    %516 = vmatprep.subr.mxu0 0.0
    %517 = vmatpush2.msra.mxu0 0.0
    %518 = vmatprep.subr.mxu0 0.0
    %519 = vmatpush2.msra.mxu0 0.0
    %520 = vmatprep.subr.mxu0 0.0
    %521 = vmatpush2.msra.mxu0 0.0
    %522 = vmatprep.subr.mxu0 0.0
    %523 = vmatpush2.msra.mxu0 0.0
    %524 = vmatprep.subr.mxu0 0.0
    %525 = vmatpush2.msra.mxu0 0.0
    %526 = vmatprep.subr.mxu0 0.0
    %527 = vmatpush2.msra.mxu0 0.0
    %528 = vmatprep.subr.mxu0 0.0
    %529 = vmatpush2.msra.mxu0 0.0
    %530 = vmatprep.mubr.f32.mxu0 0.0
    %531 = vmatmul.mubr.f32.gmra.mxu0 %v285
    %v532 = vpop.f32.mrf.mxu0
    %v533 = vadd.f32 0.0, %v532
    %v534 = vpop.f32.mrf.mxu0
    %535 = vmatprep.mubr.f32.mxu0 0.0
    %536 = vmatmul.mubr.f32.gmra.mxu0 %v288
    %v537 = vpop.f32.mrf.mxu0
    %v538 = vadd.f32 0.0, %v537
    %v539 = vpop.f32.mrf.mxu0
    %540 = vmatprep.mubr.f32.mxu0 0.0
    %541 = vmatmul.mubr.f32.gmra.mxu0 %v291
    %v542 = vpop.f32.mrf.mxu0
    %v543 = vadd.f32 0.0, %v542
    %v544 = vpop.f32.mrf.mxu0
    %545 = vmatprep.mubr.f32.mxu0 0.0
    %546 = vmatmul.mubr.f32.gmra.mxu0 %v294
    %v547 = vpop.f32.mrf.mxu0
    %v548 = vadd.f32 0.0, %v547
    %v549 = vpop.f32.mrf.mxu0
    %550 = vdwg.mxu0
    %551 = vmatprep.subr.mxu0 0.0
    %552 = vmatpush1.msra.mxu0 0.0
    %553 = vmatprep.subr.mxu0 0.0
    %554 = vmatpush1.msra.mxu0 0.0
    %555 = vmatprep.subr.mxu0 0.0
    %556 = vmatpush1.msra.mxu0 0.0
    %557 = vmatprep.subr.mxu0 0.0
    %558 = vmatpush1.msra.mxu0 0.0
    %559 = vmatprep.subr.mxu0 0.0
    %560 = vmatpush1.msra.mxu0 0.0
    %561 = vmatprep.subr.mxu0 0.0
    %562 = vmatpush1.msra.mxu0 0.0
    %563 = vmatprep.subr.mxu0 0.0
    %564 = vmatpush1.msra.mxu0 0.0
    %565 = vmatprep.subr.mxu0 0.0
    %566 = vmatpush1.msra.mxu0 0.0
    %567 = vmatprep.subr.mxu0 0.0
    %568 = vmatpush1.msra.mxu0 0.0
    %569 = vmatprep.subr.mxu0 0.0
    %570 = vmatpush1.msra.mxu0 0.0
    %571 = vmatprep.subr.mxu0 0.0
    %572 = vmatpush1.msra.mxu0 0.0
    %573 = vmatprep.subr.mxu0 0.0
    %574 = vmatpush1.msra.mxu0 0.0
    %575 = vmatprep.subr.mxu0 0.0
    %576 = vmatpush1.msra.mxu0 %v256
    %577 = vmatprep.subr.mxu0 0.0
    %578 = vmatpush1.msra.mxu0 %v251
    %579 = vmatprep.subr.mxu0 0.0
    %580 = vmatpush1.msra.mxu0 %v246
    %581 = vmatprep.subr.mxu0 0.0
    %582 = vmatpush1.msra.mxu0 %v241
    %583 = vmatprep.subr.mxu0 0.0
    %584 = vmatpush2.msra.mxu0 0.0
    %585 = vmatprep.subr.mxu0 0.0
    %586 = vmatpush2.msra.mxu0 0.0
    %587 = vmatprep.subr.mxu0 0.0
    %588 = vmatpush2.msra.mxu0 0.0
    %589 = vmatprep.subr.mxu0 0.0
    %590 = vmatpush2.msra.mxu0 0.0
    %591 = vmatprep.subr.mxu0 0.0
    %592 = vmatpush2.msra.mxu0 0.0
    %593 = vmatprep.subr.mxu0 0.0
    %594 = vmatpush2.msra.mxu0 0.0
    %595 = vmatprep.subr.mxu0 0.0
    %596 = vmatpush2.msra.mxu0 0.0
    %597 = vmatprep.subr.mxu0 0.0
    %598 = vmatpush2.msra.mxu0 0.0
    %599 = vmatprep.subr.mxu0 0.0
    %600 = vmatpush2.msra.mxu0 0.0
    %601 = vmatprep.subr.mxu0 0.0
    %602 = vmatpush2.msra.mxu0 0.0
    %603 = vmatprep.subr.mxu0 0.0
    %604 = vmatpush2.msra.mxu0 0.0
    %605 = vmatprep.subr.mxu0 0.0
    %606 = vmatpush2.msra.mxu0 0.0
    %607 = vmatprep.subr.mxu0 0.0
    %608 = vmatpush2.msra.mxu0 0.0
    %609 = vmatprep.subr.mxu0 0.0
    %610 = vmatpush2.msra.mxu0 0.0
    %611 = vmatprep.subr.mxu0 0.0
    %612 = vmatpush2.msra.mxu0 0.0
    %613 = vmatprep.subr.mxu0 0.0
    %614 = vmatpush2.msra.mxu0 0.0
    %615 = vmatprep.mubr.f32.mxu0 0.0
    %616 = vmatmul.mubr.f32.gmra.mxu0 %v285
    %v617 = vpop.f32.mrf.mxu0
    %v618 = vadd.f32 0.0, %v617
    %v619 = vpop.f32.mrf.mxu0
    %620 = vmatprep.mubr.f32.mxu0 0.0
    %621 = vmatmul.mubr.f32.gmra.mxu0 %v288
    %v622 = vpop.f32.mrf.mxu0
    %v623 = vadd.f32 0.0, %v622
    %v624 = vpop.f32.mrf.mxu0
    %625 = vmatprep.mubr.f32.mxu0 0.0
    %626 = vmatmul.mubr.f32.gmra.mxu0 %v291
    %v627 = vpop.f32.mrf.mxu0
    %v628 = vadd.f32 0.0, %v627
    %v629 = vpop.f32.mrf.mxu0
    %630 = vmatprep.mubr.f32.mxu0 0.0
    %631 = vmatmul.mubr.f32.gmra.mxu0 %v294
    %v632 = vpop.f32.mrf.mxu0
    %v633 = vadd.f32 0.0, %v632
    %v634 = vpop.f32.mrf.mxu0
    %635 = vdwg.mxu0
    %636 = vmatprep.subr.mxu0 0.0
    %637 = vmatpush1.msra.mxu0 0.0
    %638 = vmatprep.subr.mxu0 0.0
    %639 = vmatpush1.msra.mxu0 0.0
    %640 = vmatprep.subr.mxu0 0.0
    %641 = vmatpush1.msra.mxu0 0.0
    %642 = vmatprep.subr.mxu0 0.0
    %643 = vmatpush1.msra.mxu0 0.0
    %644 = vmatprep.subr.mxu0 0.0
    %645 = vmatpush1.msra.mxu0 0.0
    %646 = vmatprep.subr.mxu0 0.0
    %647 = vmatpush1.msra.mxu0 0.0
    %648 = vmatprep.subr.mxu0 0.0
    %649 = vmatpush1.msra.mxu0 0.0
    %650 = vmatprep.subr.mxu0 0.0
    %651 = vmatpush1.msra.mxu0 0.0
    %652 = vmatprep.subr.mxu0 0.0
    %653 = vmatpush1.msra.mxu0 0.0
    %654 = vmatprep.subr.mxu0 0.0
    %655 = vmatpush1.msra.mxu0 0.0
    %656 = vmatprep.subr.mxu0 0.0
    %657 = vmatpush1.msra.mxu0 0.0
    %658 = vmatprep.subr.mxu0 0.0
    %659 = vmatpush1.msra.mxu0 0.0
    %660 = vmatprep.subr.mxu0 0.0
    %661 = vmatpush1.msra.mxu0 %v276
    %662 = vmatprep.subr.mxu0 0.0
    %663 = vmatpush1.msra.mxu0 %v271
    %664 = vmatprep.subr.mxu0 0.0
    %665 = vmatpush1.msra.mxu0 %v266
    %666 = vmatprep.subr.mxu0 0.0
    %667 = vmatpush1.msra.mxu0 %v261
    %668 = vmatprep.subr.mxu0 0.0
    %669 = vmatpush2.msra.mxu0 0.0
    %670 = vmatprep.subr.mxu0 0.0
    %671 = vmatpush2.msra.mxu0 0.0
    %672 = vmatprep.subr.mxu0 0.0
    %673 = vmatpush2.msra.mxu0 0.0
    %674 = vmatprep.subr.mxu0 0.0
    %675 = vmatpush2.msra.mxu0 0.0
    %676 = vmatprep.subr.mxu0 0.0
    %677 = vmatpush2.msra.mxu0 0.0
    %678 = vmatprep.subr.mxu0 0.0
    %679 = vmatpush2.msra.mxu0 0.0
    %680 = vmatprep.subr.mxu0 0.0
    %681 = vmatpush2.msra.mxu0 0.0
    %682 = vmatprep.subr.mxu0 0.0
    %683 = vmatpush2.msra.mxu0 0.0
    %684 = vmatprep.subr.mxu0 0.0
    %685 = vmatpush2.msra.mxu0 0.0
    %686 = vmatprep.subr.mxu0 0.0
    %687 = vmatpush2.msra.mxu0 0.0
    %688 = vmatprep.subr.mxu0 0.0
    %689 = vmatpush2.msra.mxu0 0.0
    %690 = vmatprep.subr.mxu0 0.0
    %691 = vmatpush2.msra.mxu0 0.0
    %692 = vmatprep.subr.mxu0 0.0
    %693 = vmatpush2.msra.mxu0 0.0
    %694 = vmatprep.subr.mxu0 0.0
    %695 = vmatpush2.msra.mxu0 0.0
    %696 = vmatprep.subr.mxu0 0.0
    %697 = vmatpush2.msra.mxu0 0.0
    %698 = vmatprep.subr.mxu0 0.0
    %699 = vmatpush2.msra.mxu0 0.0
    %700 = vmatprep.mubr.f32.mxu0 0.0
    %701 = vmatmul.mubr.f32.gmra.mxu0 %v285
    %v702 = vpop.f32.mrf.mxu0
    %v703 = vadd.f32 0.0, %v702
    %v704 = vpop.f32.mrf.mxu0
    %705 = vmatprep.mubr.f32.mxu0 0.0
    %706 = vmatmul.mubr.f32.gmra.mxu0 %v288
    %v707 = vpop.f32.mrf.mxu0
    %v708 = vadd.f32 0.0, %v707
    %v709 = vpop.f32.mrf.mxu0
    %710 = vmatprep.mubr.f32.mxu0 0.0
    %711 = vmatmul.mubr.f32.gmra.mxu0 %v291
    %v712 = vpop.f32.mrf.mxu0
    %v713 = vadd.f32 0.0, %v712
    %v714 = vpop.f32.mrf.mxu0
    %715 = vmatprep.mubr.f32.mxu0 0.0
    %716 = vmatmul.mubr.f32.gmra.mxu0 %v294
    %v717 = vpop.f32.mrf.mxu0
    %v718 = vadd.f32 0.0, %v717
    %v719 = vpop.f32.mrf.mxu0
    %720 = vdwg.mxu0
    %v721 = vmul.f32 %v363, %v448
    %v722 = vmul.f32 %v368, %v453
    %v723 = vmul.f32 %v373, %v458
    %v724 = vmul.f32 %v378, %v463
    %v725 = vmul.f32 %v721, 0.012345679
    %v726 = vmul.f32 %v722, 0.012345679
    %v727 = vmul.f32 %v723, 0.012345679
    %v728 = vmul.f32 %v724, 0.012345679
    %v729 = vsub.f32 %v703, %v725
    %v730 = vsub.f32 %v708, %v726
    %v731 = vsub.f32 %v713, %v727
    %v732 = vsub.f32 %v718, %v728
    %v733 = vmul.f32 %v363, %v363
    %v734 = vmul.f32 %v368, %v368
    %v735 = vmul.f32 %v373, %v373
    %v736 = vmul.f32 %v378, %v378
    %v737 = vmul.f32 %v733, 0.012345679
    %v738 = vmul.f32 %v734, 0.012345679
    %v739 = vmul.f32 %v735, 0.012345679
    %v740 = vmul.f32 %v736, 0.012345679
    %v741 = vsub.f32 %v533, %v737
    %v742 = vsub.f32 %v538, %v738
    %v743 = vsub.f32 %v543, %v739
    %v744 = vsub.f32 %v548, %v740
    %v745 = vmul.f32 %v448, %v448
    %v746 = vmul.f32 %v453, %v453
    %v747 = vmul.f32 %v458, %v458
    %v748 = vmul.f32 %v463, %v463
    %v749 = vmul.f32 %v745, 0.012345679
    %v750 = vmul.f32 %v746, 0.012345679
    %v751 = vmul.f32 %v747, 0.012345679
    %v752 = vmul.f32 %v748, 0.012345679
    %v753 = vsub.f32 %v618, %v749
    %v754 = vsub.f32 %v623, %v750
    %v755 = vsub.f32 %v628, %v751
    %v756 = vsub.f32 %v633, %v752
    %v757 = vmul.f32 %v729, %v729
    %v758 = vmul.f32 %v730, %v730
    %v759 = vmul.f32 %v731, %v731
    %v760 = vmul.f32 %v732, %v732
    %v761 = vmul.f32 %v741, %v753
    %v762 = vmul.f32 %v742, %v754
    %v763 = vmul.f32 %v743, %v755
    %v764 = vmul.f32 %v744, %v756
    %v765 = vadd.f32 %v761, 1e-05
    %v766 = vadd.f32 %v762, 1e-05
    %v767 = vadd.f32 %v763, 1e-05
    %v768 = vadd.f32 %v764, 1e-05
    %v769 = vrcp.pop %v765
    %v770 = vrcp.pop %v766
    %v771 = vrcp.pop %v767
    %v772 = vrcp.pop %v768
    %v773 = vmul.f32 %v757, %v769
    %v774 = vmul.f32 %v758, %v770
    %v775 = vmul.f32 %v759, %v771
    %v776 = vmul.f32 %v760, %v772
    %v777 = vsel %vm53, %v773, 0.0
    %v778 = vsel %vm53, %v774, 0.0
    %v779 = vadd.f32 %v777, %v778
    %v780 = vsel %vm53, %v775, 0.0
    %v781 = vadd.f32 %v779, %v780
    %v782 = vsel %vm53, %v776, 0.0
    %v783 = vadd.f32 %v781, %v782
    %784 = vadd.xlane.f32.xlu0 %v783
    %v785 = vpop.xlane.xlu0 %784
    %v786 = vrot.slane %v785, 4
    %v787 = vadd.f32 %v785, %v786
    %v788 = vrot.slane %v787, 2
    %v789 = vadd.f32 %v787, %v788
    %v790 = vrot.slane %v789, 1
    %v791 = vadd.f32 %v789, %v790
    %s792 = vtos %v791
    %v793 = vstv %s792
    %794 = vst [vmem:[%s4] sm:$0xff] %v793
    // Predicated region
    $region22: #{ncc_loss.1} parent=1 // pred_check
      _
    $region23: #{ncc_loss.1} parent=1 // pred_check_branch
      %796 = sbr.rel (0) target = $region25
    $region24: #{ncc_loss.1} parent=1 // pred_region
      _
    $region25: #{ncc_loss.1} parent=1 // pred_fallthru
      _
    // Predicated region
    $region26: #{ncc_loss.1} parent=1 // pred_check
      _
    $region27: #{ncc_loss.1} parent=1 // pred_check_branch
      %798 = sbr.rel (0) target = $region29
    $region28: #{ncc_loss.1} parent=1 // pred_region
      _
    $region29: #{ncc_loss.1} parent=1 // pred_fallthru
      _
    %799 = vsyncpa [#allocation3], 1

</llo_original>
